<compile_context>
chip_gen: v7x
topology: tpu7x:2x2x1
jax: 0.10.0
libtpu: 0.0.40
codegen_flags: <defaults>
</compile_context>

<pallas_src>
import functools

import jax
import jax.numpy as jnp
import numpy as np
from jax.experimental import pallas as pl
from jax.experimental.pallas import tpu as pltpu


_PAD_MODE = {"zero": "constant", "reflect": "reflect", "replicate": "edge"}


# ----------------------------------------------------------------------------
# Pallas kernels (conv-as-GEMM with fully fused epilogue)
# ----------------------------------------------------------------------------
def _conv_eqlr_leaky_pixelnorm_kernel(w_ref, b_ref, p_ref, o_ref, *,
                                      scale, slope, eps):
    """out = pixelnorm(leaky(scale * (W @ P + b)))  for one M tile.

    w_ref: (C, K)   b_ref: (C, 1)   p_ref: (K, tm)   o_ref: (C, tm)
    """
    h = jnp.dot(w_ref[...], p_ref[...], preferred_element_type=jnp.float32)
    h = scale * (h + b_ref[...])                       # EqLR scale + conv bias
    h = jnp.where(h >= 0, h, slope * h)                # LeakyReLU(0.2)
    inv = jax.lax.rsqrt(jnp.mean(h * h, axis=0, keepdims=True) + eps)
    o_ref[...] = (h * inv).astype(o_ref.dtype)         # PixelWiseNorm (over C)


def _conv_eqlr_residual_leaky_pixelnorm_kernel(w_ref, b_ref, x_ref, p_ref,
                                               o_ref, *, scale, slope, eps):
    """out = pixelnorm(leaky(x + scale * (W @ P + b)))  for one M tile."""
    h = jnp.dot(w_ref[...], p_ref[...], preferred_element_type=jnp.float32)
    h = scale * (h + b_ref[...])
    out = x_ref[...] + h                               # residual skip
    out = jnp.where(out >= 0, out, slope * out)        # final LeakyReLU(0.2)
    inv = jax.lax.rsqrt(jnp.mean(out * out, axis=0, keepdims=True) + eps)
    o_ref[...] = (out * inv).astype(o_ref.dtype)       # final PixelWiseNorm


def _choose_tm(M, max_tm=2048):
    """Large, 128-aligned M tiles; >=2 grid steps when cheap (v7x dual-TC)."""
    if M % 128 != 0:
        return M                     # single full block (no ragged-edge risk)
    if M <= max_tm:
        half = M // 2
        if M >= 256 and half % 128 == 0:
            return half              # 2 grid steps -> both v7x TensorCores
        return M
    return max_tm


def conv3x3_fused(patches, w_flat, bias, *, scale, residual=None,
                  slope=0.2, eps=1e-8, max_tm=2048):
    """Lane-dense conv GEMM with fused epilogue.

    patches : [K, M]  (K = C*9, M = N*H*W)     w_flat : [C, K]     bias : [C]
    residual: optional [C, M] added before the final LeakyReLU+PixelNorm.
    Returns [C, M] float32.
    """
    K, M = patches.shape
    C = w_flat.shape[0]
    tm = _choose_tm(M, max_tm)
    grid = (pl.cdiv(M, tm),)
    b2 = bias.reshape(C, 1)

    w_spec = pl.BlockSpec((C, K), lambda i: (0, 0))     # resident operand
    b_spec = pl.BlockSpec((C, 1), lambda i: (0, 0))     # resident operand
    p_spec = pl.BlockSpec((K, tm), lambda i: (0, i))
    o_spec = pl.BlockSpec((C, tm), lambda i: (0, i))

    if residual is None:
        kernel = functools.partial(_conv_eqlr_leaky_pixelnorm_kernel,
                                   scale=scale, slope=slope, eps=eps)
        in_specs = [w_spec, b_spec, p_spec]
        args = (w_flat, b2, patches)
    else:
        kernel = functools.partial(_conv_eqlr_residual_leaky_pixelnorm_kernel,
                                   scale=scale, slope=slope, eps=eps)
        x_spec = pl.BlockSpec((C, tm), lambda i: (0, i))
        in_specs = [w_spec, b_spec, x_spec, p_spec]
        args = (w_flat, b2, residual, patches)

    return pl.pallas_call(
        kernel,
        out_shape=jax.ShapeDtypeStruct((C, M), jnp.float32),
        grid_spec=pltpu.PrefetchScalarGridSpec(
            num_scalar_prefetch=0,
            grid=grid,
            in_specs=in_specs,
            out_specs=o_spec,
        ),
        compiler_params=pltpu.CompilerParams(
            dimension_semantics=("parallel",)),
    )(*args)


# ----------------------------------------------------------------------------
# Glue: channel-major im2col (no per-layer transposes) + forward pass
# ----------------------------------------------------------------------------
def im2col_cm(x_cm, padding_type):
    """x_cm: [C, N, H, W] -> patches [C*9, N*H*W], K-order = (c, kh, kw)."""
    C, N, H, W = x_cm.shape
    mode = _PAD_MODE[padding_type]
    xp = jnp.pad(x_cm, ((0, 0), (0, 0), (1, 1), (1, 1)), mode=mode)
    cols = [xp[:, :, i:i + H, j:j + W] for i in range(3) for j in range(3)]
    p = jnp.stack(cols, axis=1)                # [C, 9, N, H, W]
    return p.reshape(C * 9, N * H * W)


def resnet_block_forward(params, x, padding_type="reflect"):
    """ResnetBlock forward.  x: [N, C, H, W] (NCHW, like PyTorch)."""
    N, C, H, W = x.shape
    M = N * H * W
    scale = float(np.sqrt(2.0 / (C * 9)))      # EqualizedLR He constant
    # TODO(synk): EqualizedLearningRateLayer is undefined in the spec; a runtime
    # sqrt(2/fan_in) scale on the conv output is assumed.  Dropout (if enabled)
    # is inference-mode identity; convD=3 branch is not implemented.

    x_cm = x.transpose(1, 0, 2, 3)             # NCHW -> CNHW, once at entry
    x_flat = x_cm.reshape(C, M)

    w1f = params["w1"].reshape(C, -1)          # OIHW -> [C, C*9], (c,kh,kw)
    w2f = params["w2"].reshape(C, -1)

    # conv1 + EqLR + LeakyReLU + PixelNorm (fused epilogue)
    p1 = im2col_cm(x_cm, padding_type)
    y1 = conv3x3_fused(p1, w1f, params["b1"], scale=scale)

    # conv2 + EqLR, then residual add + LeakyReLU + PixelNorm (all fused)
    p2 = im2col_cm(y1.reshape(C, N, H, W), padding_type)
    out = conv3x3_fused(p2, w2f, params["b2"], scale=scale, residual=x_flat)

    return out.reshape(C, N, H, W).transpose(1, 0, 2, 3)   # back to NCHW


# ----------------------------------------------------------------------------
# Pure-JAX reference (for correctness check)
# ----------------------------------------------------------------------------
def reference_forward(params, x, padding_type="reflect"):
    C = x.shape[1]
    scale = float(np.sqrt(2.0 / (C * 9)))
    mode = _PAD_MODE[padding_type]

    def pad_s(v):
        return jnp.pad(v, ((0, 0), (0, 0), (1, 1), (1, 1)), mode=mode)

    def conv(v, w, b):
        y = jax.lax.conv_general_dilated(
            v, w, (1, 1), "VALID",
            dimension_numbers=("NCHW", "OIHW", "NCHW"),
            precision=jax.lax.Precision.HIGHEST)
        return y + b[None, :, None, None]

    def leaky(v):
        return jnp.where(v >= 0, v, 0.2 * v)

    def pixelnorm(v, eps=1e-8):
        return v * jax.lax.rsqrt(jnp.mean(v * v, axis=1, keepdims=True) + eps)

    h = pixelnorm(leaky(scale * conv(pad_s(x), params["w1"], params["b1"])))
    h = scale * conv(pad_s(h), params["w2"], params["b2"])
    out = x + h
    return pixelnorm(leaky(out))


# ----------------------------------------------------------------------------
# Main
# ----------------------------------------------------------------------------
if __name__ == "__main__":
    # ResnetBlock(dim=8, padding_type='reflect', norm_layer=..., use_dropout=False,
    #             use_bias=True, convD=2) at small shapes.
    batch, dim, H, W = 2, 8, 16, 16
    padding_type = "reflect"

    key = jax.random.PRNGKey(0)
    k1, k2, k3, k4, k5 = jax.random.split(key, 5)
    params = {
        "w1": 0.1 * jax.random.normal(k1, (dim, dim, 3, 3), jnp.float32),
        "b1": 0.01 * jax.random.normal(k2, (dim,), jnp.float32),
        "w2": 0.1 * jax.random.normal(k3, (dim, dim, 3, 3), jnp.float32),
        "b2": 0.01 * jax.random.normal(k4, (dim,), jnp.float32),
    }
    x = jax.random.normal(k5, (batch, dim, H, W), jnp.float32)

    fwd = jax.jit(functools.partial(resnet_block_forward,
                                    padding_type=padding_type))
    out = jax.block_until_ready(fwd(params, x))
    assert out.shape == (batch, dim, H, W), out.shape

    ref_fn = jax.jit(functools.partial(reference_forward,
                                       padding_type=padding_type))
    ref = jax.block_until_ready(ref_fn(params, x))
    np.testing.assert_allclose(np.asarray(out), np.asarray(ref),
                               rtol=1e-4, atol=1e-4)

    print("KERNEL_OK")
</pallas_src>

<mosaic_0001>
module attributes {stable_mosaic.version = 11 : i64} {
  func.func @_conv_eqlr_leaky_pixelnorm_kernel(%arg0: i32, %arg1: memref<8x72xf32, #tpu.memory_space<vmem>>, %arg2: memref<8x1xf32, #tpu.memory_space<vmem>>, %arg3: memref<72x256xf32, #tpu.memory_space<vmem>>, %arg4: memref<8x256xf32, #tpu.memory_space<vmem>>) attributes {dimension_semantics = [#tpu.dimension_semantics<parallel>], iteration_bounds = array<i64: 2>, scalar_prefetch = 0 : i64, scratch_operands = 0 : i64, tpu.core_type = #tpu.core_type<tc>, window_params = [{pipeline_mode = #tpu.pipeline_mode<synchronous>, transform_indices = @transform_0, window_bounds = array<i64: 8, 72>}, {pipeline_mode = #tpu.pipeline_mode<synchronous>, transform_indices = @transform_1, window_bounds = array<i64: 8, 1>}, {transform_indices = @transform_2, window_bounds = array<i64: 72, 256>}, {transform_indices = @transform_3, window_bounds = array<i64: 8, 256>}]} {
    %c0 = arith.constant 0 : index
    %c0_0 = arith.constant 0 : index
    %0 = vector.load %arg1[%c0, %c0_0] : memref<8x72xf32, #tpu.memory_space<vmem>>, vector<8x72xf32>
    %c0_1 = arith.constant 0 : index
    %c0_2 = arith.constant 0 : index
    %1 = vector.load %arg3[%c0_1, %c0_2] : memref<72x256xf32, #tpu.memory_space<vmem>>, vector<72x256xf32>
    %cst = arith.constant dense<0.000000e+00> : vector<8x256xf32>
    %2 = tpu.matmul %0, %1, %cst {dimension_numbers = #tpu.dot_dimension_numbers<[1], [0], [0], [1], [0, 0, 1, 1], [], []>} : vector<8x72xf32>, vector<72x256xf32>, vector<8x256xf32> -> vector<8x256xf32>
    %c0_3 = arith.constant 0 : index
    %c0_4 = arith.constant 0 : index
    %3 = vector.load %arg2[%c0_3, %c0_4] : memref<8x1xf32, #tpu.memory_space<vmem>>, vector<8x1xf32>
    %4 = vector.broadcast %3 : vector<8x1xf32> to vector<8x256xf32>
    %5 = arith.addf %2, %4 : vector<8x256xf32>
    %cst_5 = arith.constant 0.166666672 : f32
    %6 = vector.broadcast %cst_5 : f32 to vector<8x256xf32>
    %7 = arith.mulf %6, %5 : vector<8x256xf32>
    %cst_6 = arith.constant 0.000000e+00 : f32
    %8 = vector.broadcast %cst_6 : f32 to vector<8x256xf32>
    %9 = arith.cmpf oge, %7, %8 : vector<8x256xf32>
    %cst_7 = arith.constant 2.000000e-01 : f32
    %10 = vector.broadcast %cst_7 : f32 to vector<8x256xf32>
    %11 = arith.mulf %10, %7 : vector<8x256xf32>
    %12 = arith.select %9, %7, %11 : vector<8x256xi1>, vector<8x256xf32>
    %13 = arith.mulf %12, %12 : vector<8x256xf32>
    %cst_8 = arith.constant dense<0.000000e+00> : vector<256xf32>
    %14 = vector.multi_reduction <add>, %13, %cst_8 [0] : vector<8x256xf32> to vector<256xf32>
    %15 = vector.shape_cast %14 : vector<256xf32> to vector<1x256xf32>
    %cst_9 = arith.constant 8.000000e+00 : f32
    %16 = vector.broadcast %cst_9 : f32 to vector<1x256xf32>
    %17 = arith.divf %15, %16 : vector<1x256xf32>
    %cst_10 = arith.constant 9.99999993E-9 : f32
    %18 = vector.broadcast %cst_10 : f32 to vector<1x256xf32>
    %19 = arith.addf %17, %18 : vector<1x256xf32>
    %20 = math.rsqrt %19 : vector<1x256xf32>
    %21 = vector.broadcast %20 : vector<1x256xf32> to vector<8x256xf32>
    %22 = arith.mulf %12, %21 : vector<8x256xf32>
    %c0_11 = arith.constant 0 : index
    %c0_12 = arith.constant 0 : index
    %23 = vector.load %arg4[%c0_11, %c0_12] : memref<8x256xf32, #tpu.memory_space<vmem>>, vector<8x256xf32>
    tpu.vector_store %arg4[%c0_11, %c0_12], %22 {strides = array<i32>} : memref<8x256xf32, #tpu.memory_space<vmem>>, vector<8x256xf32>,
    return
  }
  func.func @transform_0(%arg0: i32) -> (i32, i32) {
    %c0_i32 = arith.constant 0 : i32
    %c0_i32_0 = arith.constant 0 : i32
    %c0_i32_1 = arith.constant 0 : i32
    return %c0_i32, %c0_i32_0 : i32, i32
  }
  func.func @transform_1(%arg0: i32) -> (i32, i32) {
    %c0_i32 = arith.constant 0 : i32
    %c0_i32_0 = arith.constant 0 : i32
    %c0_i32_1 = arith.constant 0 : i32
    return %c0_i32, %c0_i32_0 : i32, i32
  }
  func.func @transform_2(%arg0: i32) -> (i32, i32) {
    %c0_i32 = arith.constant 0 : i32
    %c0_i32_0 = arith.constant 0 : i32
    return %c0_i32, %arg0 : i32, i32
  }
  func.func @transform_3(%arg0: i32) -> (i32, i32) {
    %c0_i32 = arith.constant 0 : i32
    %c0_i32_0 = arith.constant 0 : i32
    return %c0_i32, %arg0 : i32, i32
  }
}

module attributes {stable_mosaic.version = 11 : i64} {
  func.func @_conv_eqlr_residual_leaky_pixelnorm_kernel(%arg0: i32, %arg1: memref<8x72xf32, #tpu.memory_space<vmem>>, %arg2: memref<8x1xf32, #tpu.memory_space<vmem>>, %arg3: memref<8x256xf32, #tpu.memory_space<vmem>>, %arg4: memref<72x256xf32, #tpu.memory_space<vmem>>, %arg5: memref<8x256xf32, #tpu.memory_space<vmem>>) attributes {dimension_semantics = [#tpu.dimension_semantics<parallel>], iteration_bounds = array<i64: 2>, scalar_prefetch = 0 : i64, scratch_operands = 0 : i64, tpu.core_type = #tpu.core_type<tc>, window_params = [{pipeline_mode = #tpu.pipeline_mode<synchronous>, transform_indices = @transform_0, window_bounds = array<i64: 8, 72>}, {pipeline_mode = #tpu.pipeline_mode<synchronous>, transform_indices = @transform_1, window_bounds = array<i64: 8, 1>}, {transform_indices = @transform_2, window_bounds = array<i64: 8, 256>}, {transform_indices = @transform_3, window_bounds = array<i64: 72, 256>}, {transform_indices = @transform_4, window_bounds = array<i64: 8, 256>}]} {
    %c0 = arith.constant 0 : index
    %c0_0 = arith.constant 0 : index
    %0 = vector.load %arg1[%c0, %c0_0] : memref<8x72xf32, #tpu.memory_space<vmem>>, vector<8x72xf32>
    %c0_1 = arith.constant 0 : index
    %c0_2 = arith.constant 0 : index
    %1 = vector.load %arg4[%c0_1, %c0_2] : memref<72x256xf32, #tpu.memory_space<vmem>>, vector<72x256xf32>
    %cst = arith.constant dense<0.000000e+00> : vector<8x256xf32>
    %2 = tpu.matmul %0, %1, %cst {dimension_numbers = #tpu.dot_dimension_numbers<[1], [0], [0], [1], [0, 0, 1, 1], [], []>} : vector<8x72xf32>, vector<72x256xf32>, vector<8x256xf32> -> vector<8x256xf32>
    %c0_3 = arith.constant 0 : index
    %c0_4 = arith.constant 0 : index
    %3 = vector.load %arg2[%c0_3, %c0_4] : memref<8x1xf32, #tpu.memory_space<vmem>>, vector<8x1xf32>
    %4 = vector.broadcast %3 : vector<8x1xf32> to vector<8x256xf32>
    %5 = arith.addf %2, %4 : vector<8x256xf32>
    %cst_5 = arith.constant 0.166666672 : f32
    %6 = vector.broadcast %cst_5 : f32 to vector<8x256xf32>
    %7 = arith.mulf %6, %5 : vector<8x256xf32>
    %c0_6 = arith.constant 0 : index
    %c0_7 = arith.constant 0 : index
    %8 = vector.load %arg3[%c0_6, %c0_7] : memref<8x256xf32, #tpu.memory_space<vmem>>, vector<8x256xf32>
    %9 = arith.addf %8, %7 : vector<8x256xf32>
    %cst_8 = arith.constant 0.000000e+00 : f32
    %10 = vector.broadcast %cst_8 : f32 to vector<8x256xf32>
    %11 = arith.cmpf oge, %9, %10 : vector<8x256xf32>
    %cst_9 = arith.constant 2.000000e-01 : f32
    %12 = vector.broadcast %cst_9 : f32 to vector<8x256xf32>
    %13 = arith.mulf %12, %9 : vector<8x256xf32>
    %14 = arith.select %11, %9, %13 : vector<8x256xi1>, vector<8x256xf32>
    %15 = arith.mulf %14, %14 : vector<8x256xf32>
    %cst_10 = arith.constant dense<0.000000e+00> : vector<256xf32>
    %16 = vector.multi_reduction <add>, %15, %cst_10 [0] : vector<8x256xf32> to vector<256xf32>
    %17 = vector.shape_cast %16 : vector<256xf32> to vector<1x256xf32>
    %cst_11 = arith.constant 8.000000e+00 : f32
    %18 = vector.broadcast %cst_11 : f32 to vector<1x256xf32>
    %19 = arith.divf %17, %18 : vector<1x256xf32>
    %cst_12 = arith.constant 9.99999993E-9 : f32
    %20 = vector.broadcast %cst_12 : f32 to vector<1x256xf32>
    %21 = arith.addf %19, %20 : vector<1x256xf32>
    %22 = math.rsqrt %21 : vector<1x256xf32>
    %23 = vector.broadcast %22 : vector<1x256xf32> to vector<8x256xf32>
    %24 = arith.mulf %14, %23 : vector<8x256xf32>
    %c0_13 = arith.constant 0 : index
    %c0_14 = arith.constant 0 : index
    %25 = vector.load %arg5[%c0_13, %c0_14] : memref<8x256xf32, #tpu.memory_space<vmem>>, vector<8x256xf32>
    tpu.vector_store %arg5[%c0_13, %c0_14], %24 {strides = array<i32>} : memref<8x256xf32, #tpu.memory_space<vmem>>, vector<8x256xf32>,
    return
  }
  func.func @transform_0(%arg0: i32) -> (i32, i32) {
    %c0_i32 = arith.constant 0 : i32
    %c0_i32_0 = arith.constant 0 : i32
    %c0_i32_1 = arith.constant 0 : i32
    return %c0_i32, %c0_i32_0 : i32, i32
  }
  func.func @transform_1(%arg0: i32) -> (i32, i32) {
    %c0_i32 = arith.constant 0 : i32
    %c0_i32_0 = arith.constant 0 : i32
    %c0_i32_1 = arith.constant 0 : i32
    return %c0_i32, %c0_i32_0 : i32, i32
  }
  func.func @transform_2(%arg0: i32) -> (i32, i32) {
    %c0_i32 = arith.constant 0 : i32
    %c0_i32_0 = arith.constant 0 : i32
    return %c0_i32, %arg0 : i32, i32
  }
  func.func @transform_3(%arg0: i32) -> (i32, i32) {
    %c0_i32 = arith.constant 0 : i32
    %c0_i32_0 = arith.constant 0 : i32
    return %c0_i32, %arg0 : i32, i32
  }
  func.func @transform_4(%arg0: i32) -> (i32, i32) {
    %c0_i32 = arith.constant 0 : i32
    %c0_i32_0 = arith.constant 0 : i32
    return %c0_i32, %arg0 : i32, i32
  }
}

</mosaic_0001>

<llo_original>
// kernel: resnet_block_forward.2
$region0: #{resnet_block_forward.2}
  #allocation0 [shape = 'u32[]', space=smem, size = 0x4, offset = 0x4, fixed_abs, tag = 'smem constant byte address 0x4 - core index']
  #allocation1 [shape = 'u32[144,128]{1,0:T(1,128)}', space=vmem, size = 0x12000, scoped, tag = 'internal scratch']
  %s0 = inlined_call_operand.vmem [shape: f32[8,72], index: 0, kind: input, shape index: {}]
  %s1 = inlined_call_operand.vmem [shape: f32[8,1], index: 1, kind: input, shape index: {}]
  %s2 = inlined_call_operand.vmem [shape: f32[72,512], index: 2, kind: input, shape index: {}]
  %s3 = inlined_call_operand.vmem [shape: f32[8,512], index: 3, kind: output, shape index: {}]
  %s4 = sld [smem:[#allocation0]]
  $region68: #{resnet_block_forward.2} parent=0
    _
  %s6 = ssub.s32 1, %s4
  %s7 = scalar_select 0, %s6, %s4
  $region1: #{resnet_block_forward.2} parent=0
    #allocation2 [shape = 'u8[147456]{0}', space=vmem, size = 0x24000, scoped, tag = 'input window, operand 2']
    loop: start=0, step=1, limit=4
    $region2: #{resnet_block_forward.2} parent=1 // loop_pre_header
      _
    $region3: #{resnet_block_forward.2} parent=1 // loop_header
      %s9 = sphi 0, %s13
      %p10 = scmp.ge.s32.totalorder %s9, 4
      %s17 = sphi 0, %s17
      %s19 = sphi 0, %s17
      %s20 = sphi 0, %s19
      %s34 = sphi 0, %s20
      %s38 = sphi 0, %s38
      %s40 = sphi 0, %s38
      %s41 = sphi 0, %s40
      %s55 = sphi 0, %s41
      %s61 = sphi 0, %s63
      %s64 = sphi 0, %s61
      %s65 = sphi 0, %s64
      %s81 = sphi 0, %s65
      %s87 = sphi 0, %s89
      %s90 = sphi 0, %s87
      %s91 = sphi 0, %s90
      %s107 = sphi 0, %s91
    $region4: #{resnet_block_forward.2} parent=1 // loop_header_branch
      %12 = sbr.rel (%p10) target = $region8
    $region5: #{resnet_block_forward.2} parent=1 // loop_body
      %s14 = ssub.s32 %s9, 1
      %s15 = ssub.s32 %s9, 2
      %s16 = sadd.s32 %s9, 1
      %s18 = sadd.s32 %s17, 1
      %p21 = scmp.eq.s32.totalorder %s9, 1
      %p22 = scmp.ne.s32.totalorder %s17, %s19
      %p23 = scmp.eq.s32.totalorder %s9, 0
      %p24 = por %p22, %p23
      %p25 = scmp.ne.s32.totalorder %s17, %s19
      %p26 = scmp.eq.s32.totalorder %s14, 1
      %p27 = por %p25, %p26
      %p28 = scmp.ne.s32.totalorder %s19, %s20
      %p29 = scmp.eq.s32.totalorder %s14, 0
      %p30 = por %p28, %p29
      %p31 = scmp.ne.s32.totalorder %s19, %s20
      %p32 = scmp.eq.s32.totalorder %s15, 1
      %p33 = por %p31, %p32
      %p35 = scmp.ne.s32.totalorder %s20, %s34
      %p36 = scmp.eq.s32.totalorder %s15, 0
      %p37 = por %p35, %p36
      %s39 = sadd.s32 %s38, 1
      %p42 = scmp.eq.s32.totalorder %s9, 1
      %p43 = scmp.ne.s32.totalorder %s38, %s40
      %p44 = scmp.eq.s32.totalorder %s9, 0
      %p45 = por %p43, %p44
      %p46 = scmp.ne.s32.totalorder %s38, %s40
      %p47 = scmp.eq.s32.totalorder %s14, 1
      %p48 = por %p46, %p47
      %p49 = scmp.ne.s32.totalorder %s40, %s41
      %p50 = scmp.eq.s32.totalorder %s14, 0
      %p51 = por %p49, %p50
      %p52 = scmp.ne.s32.totalorder %s40, %s41
      %p53 = scmp.eq.s32.totalorder %s15, 1
      %p54 = por %p52, %p53
      %p56 = scmp.ne.s32.totalorder %s41, %s55
      %p57 = scmp.eq.s32.totalorder %s15, 0
      %p58 = por %p56, %p57
      %s59 = ssub.s32 %s9, %s16
      %p60 = scmp.eq.s32.totalorder %s59, 0
      %s62 = sadd.s32 %s61, 1
      %s63 = scalar_select %p60, %s61, %s62
      %p66 = pneg %p60
      %p67 = scmp.eq.s32.totalorder %s9, 1
      %p68 = por %p66, %p67
      %p69 = scmp.ne.s32.totalorder %s61, %s64
      %p70 = scmp.eq.s32.totalorder %s9, 0
      %p71 = por %p69, %p70
      %p72 = scmp.ne.s32.totalorder %s61, %s64
      %p73 = scmp.eq.s32.totalorder %s14, 1
      %p74 = por %p72, %p73
      %p75 = scmp.ne.s32.totalorder %s64, %s65
      %p76 = scmp.eq.s32.totalorder %s14, 0
      %p77 = por %p75, %p76
      %p78 = scmp.ne.s32.totalorder %s64, %s65
      %p79 = scmp.eq.s32.totalorder %s15, 1
      %p80 = por %p78, %p79
      %p82 = scmp.ne.s32.totalorder %s65, %s81
      %p83 = scmp.eq.s32.totalorder %s15, 0
      %p84 = por %p82, %p83
      %s85 = ssub.s32 %s9, %s16
      %p86 = scmp.eq.s32.totalorder %s85, 0
      %s88 = sadd.s32 %s87, 1
      %s89 = scalar_select %p86, %s87, %s88
      %p92 = pneg %p86
      %p93 = scmp.eq.s32.totalorder %s9, 1
      %p94 = por %p92, %p93
      %p95 = scmp.ne.s32.totalorder %s87, %s90
      %p96 = scmp.eq.s32.totalorder %s9, 0
      %p97 = por %p95, %p96
      %p98 = scmp.ne.s32.totalorder %s87, %s90
      %p99 = scmp.eq.s32.totalorder %s14, 1
      %p100 = por %p98, %p99
      %p101 = scmp.ne.s32.totalorder %s90, %s91
      %p102 = scmp.eq.s32.totalorder %s14, 0
      %p103 = por %p101, %p102
      %p104 = scmp.ne.s32.totalorder %s90, %s91
      %p105 = scmp.eq.s32.totalorder %s15, 1
      %p106 = por %p104, %p105
      %p108 = scmp.ne.s32.totalorder %s91, %s107
      %p109 = scmp.eq.s32.totalorder %s15, 0
      %p110 = por %p108, %p109
      %p111 = scmp.le.s32.totalorder 1, %s9
      %p112 = scmp.lt.s32.totalorder %s9, 3
      %p113 = pnand %p111, %p112
      %p114 = pneg %p113
      // Predicated region
      $region9: #{resnet_block_forward.2} parent=5 // pred_check
        _
      $region10: #{resnet_block_forward.2} parent=5 // pred_check_branch
        %116 = sbr.rel (%p113) target = $region12
      $region11: #{resnet_block_forward.2} parent=5 // pred_region
        %s117 = ssub.s32 %s9, 1
        // Predicated region
        $region13: #{resnet_block_forward.2} parent=11 // pred_check
          %p118 = pneg %p30
        $region14: #{resnet_block_forward.2} parent=11 // pred_check_branch
          %120 = sbr.rel (%p118) target = $region16
        $region15: #{resnet_block_forward.2} parent=11 // pred_region
          _
        $region16: #{resnet_block_forward.2} parent=11 // pred_fallthru
          _
        // Predicated region
        $region17: #{resnet_block_forward.2} parent=11 // pred_check
          %p121 = pneg %p51
        $region18: #{resnet_block_forward.2} parent=11 // pred_check_branch
          %123 = sbr.rel (%p121) target = $region20
        $region19: #{resnet_block_forward.2} parent=11 // pred_region
          _
        $region20: #{resnet_block_forward.2} parent=11 // pred_fallthru
          _
      $region12: #{resnet_block_forward.2} parent=5 // pred_fallthru
        _
      %p124 = scmp.lt.s32.totalorder %s9, 2
      // Predicated region
      $region21: #{resnet_block_forward.2} parent=5 // pred_check
        %p125 = pneg %p124
      $region22: #{resnet_block_forward.2} parent=5 // pred_check_branch
        %127 = sbr.rel (%p125) target = $region24
      $region23: #{resnet_block_forward.2} parent=5 // pred_region
        // Predicated region
        $region25: #{resnet_block_forward.2} parent=23 // pred_check
          %p128 = pneg %p71
        $region26: #{resnet_block_forward.2} parent=23 // pred_check_branch
          %130 = sbr.rel (%p128) target = $region28
        $region27: #{resnet_block_forward.2} parent=23 // pred_region
          %s131 = sand.u32 %s61, 1
          %s132 = sand.u32 %s61, 1
          %s133 = smul.addr %s132, 144
          %s134 = scalar_lea.vmem [#allocation2], %s133
          %s135 = smul.u32 2, %s9
          %s136 = smul.addr %s135, 8
          %s137 = scalar_lea.vmem %s2, %s136
          // Predicated region
          $region29: #{resnet_block_forward.2} parent=27 // pred_check
            _
          $region30: #{resnet_block_forward.2} parent=27 // pred_check_branch
            %139 = sbr.rel (0) target = $region32
          $region31: #{resnet_block_forward.2} parent=27 // pred_region
            // Predicated region
            $region33: #{resnet_block_forward.2} parent=31 // pred_check
              _
            $region34: #{resnet_block_forward.2} parent=31 // pred_check_branch
              %141 = sbr.rel (0) target = $region36
            $region35: #{resnet_block_forward.2} parent=31 // pred_region
              loop: start=0, step=1, limit=1
              $region37: #{resnet_block_forward.2} parent=35 // loop_pre_header
                _
              $region38: #{resnet_block_forward.2} parent=35 // loop_header
                %s143 = sphi 0, %s147
                %p144 = scmp.ge.s32.totalorder %s143, 1
                %s148 = sphi %s137, %s137
                %s149 = sphi %s134, %s134
              $region39: #{resnet_block_forward.2} parent=35 // loop_header_branch
                %146 = sbr.rel (%p144) target = $region43
              $region40: #{resnet_block_forward.2} parent=35 // loop_body
                %v150 = vld [vmem:[%s148] sm:$0xff]
                %151 = vst [vmem:[%s149] sm:$0xff] %v150
                %v152 = vld [vmem:[%s148 + $0x8] sm:$0xff]
                %153 = vst [vmem:[%s149 + $0x8] sm:$0xff] %v152
                %v154 = vld [vmem:[%s148 + $0x20] sm:$0xff]
                %155 = vst [vmem:[%s149 + $0x10] sm:$0xff] %v154
                %v156 = vld [vmem:[%s148 + $0x28] sm:$0xff]
                %157 = vst [vmem:[%s149 + $0x18] sm:$0xff] %v156
                %v158 = vld [vmem:[%s148 + $0x40] sm:$0xff]
                %159 = vst [vmem:[%s149 + $0x20] sm:$0xff] %v158
                %v160 = vld [vmem:[%s148 + $0x48] sm:$0xff]
                %161 = vst [vmem:[%s149 + $0x28] sm:$0xff] %v160
                %v162 = vld [vmem:[%s148 + $0x60] sm:$0xff]
                %163 = vst [vmem:[%s149 + $0x30] sm:$0xff] %v162
                %v164 = vld [vmem:[%s148 + $0x68] sm:$0xff]
                %165 = vst [vmem:[%s149 + $0x38] sm:$0xff] %v164
                %v166 = vld [vmem:[%s148 + $0x80] sm:$0xff]
                %167 = vst [vmem:[%s149 + $0x40] sm:$0xff] %v166
                %v168 = vld [vmem:[%s148 + $0x88] sm:$0xff]
                %169 = vst [vmem:[%s149 + $0x48] sm:$0xff] %v168
                %v170 = vld [vmem:[%s148 + $0xa0] sm:$0xff]
                %171 = vst [vmem:[%s149 + $0x50] sm:$0xff] %v170
                %v172 = vld [vmem:[%s148 + $0xa8] sm:$0xff]
                %173 = vst [vmem:[%s149 + $0x58] sm:$0xff] %v172
                %v174 = vld [vmem:[%s148 + $0xc0] sm:$0xff]
                %175 = vst [vmem:[%s149 + $0x60] sm:$0xff] %v174
                %v176 = vld [vmem:[%s148 + $0xc8] sm:$0xff]
                %177 = vst [vmem:[%s149 + $0x68] sm:$0xff] %v176
                %v178 = vld [vmem:[%s148 + $0xe0] sm:$0xff]
                %179 = vst [vmem:[%s149 + $0x70] sm:$0xff] %v178
                %v180 = vld [vmem:[%s148 + $0xe8] sm:$0xff]
                %181 = vst [vmem:[%s149 + $0x78] sm:$0xff] %v180
                %v182 = vld [vmem:[%s148 + $0x100] sm:$0xff]
                %183 = vst [vmem:[%s149 + $0x80] sm:$0xff] %v182
                %v184 = vld [vmem:[%s148 + $0x108] sm:$0xff]
                %185 = vst [vmem:[%s149 + $0x88] sm:$0xff] %v184
              $region41: #{resnet_block_forward.2} parent=35 // loop_footer
                %s147 = sadd.s32 1, %s143
              $region42: #{resnet_block_forward.2} parent=35 // loop_footer_branch
                %142 = sbr.rel target = $region38
              $region43: #{resnet_block_forward.2} parent=35 // loop_exit
                _
            $region36: #{resnet_block_forward.2} parent=31 // pred_fallthru
              _
            // Predicated region
            $region44: #{resnet_block_forward.2} parent=31 // pred_check
              _
            $region45: #{resnet_block_forward.2} parent=31 // pred_check_branch
              %187 = sbr.rel target = $region47
            $region46: #{resnet_block_forward.2} parent=31 // pred_region
              _
            $region47: #{resnet_block_forward.2} parent=31 // pred_fallthru
              _
          $region32: #{resnet_block_forward.2} parent=27 // pred_fallthru
            _
          %188 = vnop
        $region28: #{resnet_block_forward.2} parent=23 // pred_fallthru
          _
      $region24: #{resnet_block_forward.2} parent=5 // pred_fallthru
        _
      %p189 = scmp.le.s32.totalorder 1, %s9
      %p190 = scmp.lt.s32.totalorder %s9, 3
      %p191 = pnand %p189, %p190
      %p192 = pneg %p191
      // Predicated region
      $region48: #{resnet_block_forward.2} parent=5 // pred_check
        _
      $region49: #{resnet_block_forward.2} parent=5 // pred_check_branch
        %194 = sbr.rel (%p191) target = $region51
      $region50: #{resnet_block_forward.2} parent=5 // pred_region
        %s195 = ssub.s32 %s9, 1
        %s196 = sand.u32 %s64, 1
        %s197 = sand.u32 %s64, 1
        %s198 = smul.addr %s197, 144
        %s199 = scalar_lea.vmem [#allocation2], %s198
        // Predicated region
        $region52: #{resnet_block_forward.2} parent=50 // pred_check
          %p200 = pneg %p77
        $region53: #{resnet_block_forward.2} parent=50 // pred_check_branch
          %202 = sbr.rel (%p200) target = $region55
        $region54: #{resnet_block_forward.2} parent=50 // pred_region
          _
        $region55: #{resnet_block_forward.2} parent=50 // pred_fallthru
          _
        %p203 = pneg %p30
        %p204 = pneg %p27
        %p205 = pneg %p51
        %p206 = pneg %p48
        %s207 = sand.u32 %s64, 1
        %s208 = sand.u32 %s64, 1
        %s209 = smul.addr %s208, 144
        %s210 = scalar_lea.vmem [#allocation2], %s209
        %p211 = pneg %p77
        %p212 = pneg %p74
        %p213 = pneg %p103
        %p214 = pneg %p100
        %s215 = smul.u32 2, %s14
        %p216 = scmp.lt.s32.totalorder %s215, 3
        %s217 = scalar_select %p216, %s215, 3
        %s218 = smul.addr %s217, 8
        %s219 = scalar_lea.vmem %s3, %s218
        %s220 = smul.u32 2, %s14
        %s221 = smul.u32 2, %s14
        %p222 = scmp.lt.s32.totalorder %s221, 3
        %s223 = scalar_select %p222, %s221, 3
        %s224 = smul.addr %s223, 8
        %s225 = scalar_lea.vmem %s3, %s224
        %s226 = smul.u32 2, %s14
        %v227 = vld [vmem:[%s0] sm:$0xff]
        %v228 = vld [vmem:[%s199] sm:$0xff]
        %v229 = vld [vmem:[%s199 + $0x8] sm:$0xff]
        %v230 = vld [vmem:[%s199 + $0x10] sm:$0xff]
        %v231 = vld [vmem:[%s199 + $0x18] sm:$0xff]
        %v232 = vld [vmem:[%s199 + $0x20] sm:$0xff]
        %v233 = vld [vmem:[%s199 + $0x28] sm:$0xff]
        %v234 = vld [vmem:[%s199 + $0x30] sm:$0xff]
        %v235 = vld [vmem:[%s199 + $0x38] sm:$0xff]
        %v236 = vld [vmem:[%s199 + $0x40] sm:$0xff]
        %v237 = vld [vmem:[%s199 + $0x48] sm:$0xff]
        %v238 = vld [vmem:[%s199 + $0x50] sm:$0xff]
        %v239 = vld [vmem:[%s199 + $0x58] sm:$0xff]
        %v240 = vld [vmem:[%s199 + $0x60] sm:$0xff]
        %v241 = vld [vmem:[%s199 + $0x68] sm:$0xff]
        %v242 = vld [vmem:[%s199 + $0x70] sm:$0xff]
        %v243 = vld [vmem:[%s199 + $0x78] sm:$0xff]
        %v244 = vld [vmem:[%s199 + $0x80] sm:$0xff]
        %v245 = vld [vmem:[%s199 + $0x88] sm:$0xff]
        %v246 = vld [vmem:[%s1] sm:$0xff]
        %248 = vset.pattern.permute.xlu0 0
        %249 = vperm.xlu0 %248, %v246
        %v250 = vpop.permute.xlu0 %249
        %vm252 = vcmask 588800
        %v254 = vsel %vm252, %v227, 0
        %256 = vmatprep.subr.mxu0 %v229
        %257 = vmatpush1.msra.mxu0 %v228
        %258 = vmatprep.subr.mxu0 %v231
        %259 = vmatpush1.msra.mxu0 %v230
        %260 = vmatprep.subr.mxu0 %v233
        %261 = vmatpush1.msra.mxu0 %v232
        %262 = vmatprep.subr.mxu0 %v235
        %263 = vmatpush1.msra.mxu0 %v234
        %264 = vmatprep.subr.mxu0 %v237
        %265 = vmatpush1.msra.mxu0 %v236
        %266 = vmatprep.subr.mxu0 %v239
        %267 = vmatpush1.msra.mxu0 %v238
        %268 = vmatprep.subr.mxu0 %v241
        %269 = vmatpush1.msra.mxu0 %v240
        %270 = vmatprep.subr.mxu0 %v243
        %271 = vmatpush1.msra.mxu0 %v242
        %272 = vmatprep.subr.mxu0 %v245
        %273 = vmatpush1.msra.mxu0 %v244
        %274 = vmatprep.subr.mxu0 0.0
        %275 = vmatpush1.msra.mxu0 0.0
        %276 = vmatprep.subr.mxu0 0.0
        %277 = vmatpush1.msra.mxu0 0.0
        %278 = vmatprep.subr.mxu0 0.0
        %279 = vmatpush1.msra.mxu0 0.0
        %280 = vmatprep.subr.mxu0 0.0
        %281 = vmatpush1.msra.mxu0 0.0
        %282 = vmatprep.subr.mxu0 0.0
        %283 = vmatpush1.msra.mxu0 0.0
        %284 = vmatprep.subr.mxu0 0.0
        %285 = vmatpush1.msra.mxu0 0.0
        %286 = vmatprep.subr.mxu0 0.0
        %287 = vmatpush1.msra.mxu0 0.0
        %288 = vmatprep.subr.mxu0 0.0
        %289 = vmatpush1.msra.mxu0 0.0
        %290 = vmatprep.subr.mxu0 0.0
        %291 = vmatpush1.msra.mxu0 0.0
        %292 = vmatprep.subr.mxu0 0.0
        %293 = vmatpush1.msra.mxu0 0.0
        %294 = vmatprep.subr.mxu0 0.0
        %295 = vmatpush1.msra.mxu0 0.0
        %296 = vmatprep.subr.mxu0 0.0
        %297 = vmatpush1.msra.mxu0 0.0
        %298 = vmatprep.subr.mxu0 0.0
        %299 = vmatpush1.msra.mxu0 0.0
        %300 = vmatprep.subr.mxu0 0.0
        %301 = vmatpush1.msra.mxu0 0.0
        %302 = vmatprep.subr.mxu0 0.0
        %303 = vmatpush1.msra.mxu0 0.0
        %304 = vmatprep.subr.mxu0 0.0
        %305 = vmatpush1.msra.mxu0 0.0
        %306 = vmatprep.subr.mxu0 0.0
        %307 = vmatpush1.msra.mxu0 0.0
        %308 = vmatprep.subr.mxu0 0.0
        %309 = vmatpush1.msra.mxu0 0.0
        %310 = vmatprep.subr.mxu0 0.0
        %311 = vmatpush1.msra.mxu0 0.0
        %312 = vmatprep.subr.mxu0 0.0
        %313 = vmatpush1.msra.mxu0 0.0
        %314 = vmatprep.subr.mxu0 0.0
        %315 = vmatpush1.msra.mxu0 0.0
        %316 = vmatprep.subr.mxu0 0.0
        %317 = vmatpush1.msra.mxu0 0.0
        %318 = vmatprep.subr.mxu0 0.0
        %319 = vmatpush1.msra.mxu0 0.0
        %320 = vmatprep.mubr.f32.mxu0 0.0
        %321 = vmatmul.mubr.f32.gmra.mrb[0].mxu0 %v254
        %v322 = vpop.f32.mrb[0].mxu0
        %v323 = vadd.f32 %v250, %v322
        %v324 = vpop.f32.mrb[0].mxu0
        %v325 = vadd.f32 %v250, %v324
        %326 = vdwg.mxu0
        %v327 = vmul.f32 %v323, 0.16666667
        %v328 = vmul.f32 %v325, 0.16666667
        %vm329 = vcmp.ge.f32.partialorder %v327, 0.0
        %vm330 = vcmp.ge.f32.partialorder %v328, 0.0
        %v331 = vmul.f32 %v327, 0.2
        %v332 = vmul.f32 %v328, 0.2
        %v333 = vsel %vm329, %v327, %v331
        %v334 = vsel %vm330, %v328, %v332
        %v335 = vmul.f32 %v333, %v333
        %v336 = vmul.f32 %v334, %v334
        %v337 = vrot.slane %v335, 4
        %v338 = vadd.f32 %v335, %v337
        %v339 = vrot.slane %v338, 2
        %v340 = vadd.f32 %v338, %v339
        %v341 = vrot.slane %v340, 1
        %v342 = vadd.f32 %v340, %v341
        %v343 = vrot.slane %v336, 4
        %v344 = vadd.f32 %v336, %v343
        %v345 = vrot.slane %v344, 2
        %v346 = vadd.f32 %v344, %v345
        %v347 = vrot.slane %v346, 1
        %v348 = vadd.f32 %v346, %v347
        %v349 = vrcp.pop 8.0
        %v350 = vmul.f32 %v342, %v349
        %v351 = vmul.f32 %v348, %v349
        %v352 = vadd.f32 %v350, 1e-08
        %v353 = vadd.f32 %v351, 1e-08
        %v354 = vrsqrt.pop %v352
        %v355 = vrsqrt.pop %v353
        %v356 = vmul.f32 %v333, %v354
        %v357 = vmul.f32 %v334, %v355
        %358 = vst [vmem:[%s225] sm:$0xff] %v356
        %359 = vst [vmem:[%s225 + $0x8] sm:$0xff] %v357
        %s360 = smul.u32 2, %s14
        %p361 = scmp.lt.s32.totalorder %s360, 3
        %s362 = scalar_select %p361, %s360, 3
        %s363 = smul.addr %s362, 8
        %s364 = scalar_lea.vmem %s3, %s363
        // Predicated region
        $region56: #{resnet_block_forward.2} parent=50 // pred_check
          %p365 = pneg %p100
        $region57: #{resnet_block_forward.2} parent=50 // pred_check_branch
          %367 = sbr.rel (%p365) target = $region59
        $region58: #{resnet_block_forward.2} parent=50 // pred_region
          %s368 = smul.u32 2, %s14
        $region59: #{resnet_block_forward.2} parent=50 // pred_fallthru
          _
      $region51: #{resnet_block_forward.2} parent=5 // pred_fallthru
        _
      %p369 = scmp.le.s32.totalorder 2, %s9
      // Predicated region
      $region60: #{resnet_block_forward.2} parent=5 // pred_check
        %p370 = pneg %p369
      $region61: #{resnet_block_forward.2} parent=5 // pred_check_branch
        %372 = sbr.rel (%p370) target = $region63
      $region62: #{resnet_block_forward.2} parent=5 // pred_region
        %s373 = ssub.s32 %s9, 2
        // Predicated region
        $region64: #{resnet_block_forward.2} parent=62 // pred_check
          %p374 = pneg %p106
        $region65: #{resnet_block_forward.2} parent=62 // pred_check_branch
          %376 = sbr.rel (%p374) target = $region67
        $region66: #{resnet_block_forward.2} parent=62 // pred_region
          %s377 = smul.u32 2, %s15
          %p378 = scmp.lt.s32.totalorder %s377, 3
          %s379 = scalar_select %p378, %s377, 3
          %s380 = smul.addr %s379, 8
          %s381 = scalar_lea.vmem %s3, %s380
        $region67: #{resnet_block_forward.2} parent=62 // pred_fallthru
          _
      $region63: #{resnet_block_forward.2} parent=5 // pred_fallthru
        _
    $region6: #{resnet_block_forward.2} parent=1 // loop_footer
      %s13 = sadd.s32 1, %s9
    $region7: #{resnet_block_forward.2} parent=1 // loop_footer_branch
      %8 = sbr.rel target = $region3
    $region8: #{resnet_block_forward.2} parent=1 // loop_exit
      _

// kernel: resnet_block_forward.3
$region0: #{resnet_block_forward.3}
  #allocation0 [shape = 'u32[]', space=smem, size = 0x4, offset = 0x4, fixed_abs, tag = 'smem constant byte address 0x4 - core index']
  #allocation1 [shape = 'u32[144,128]{1,0:T(1,128)}', space=vmem, size = 0x12000, scoped, tag = 'internal scratch']
  %s0 = inlined_call_operand.vmem [shape: f32[8,72], index: 0, kind: input, shape index: {}]
  %s1 = inlined_call_operand.vmem [shape: f32[8,1], index: 1, kind: input, shape index: {}]
  %s2 = inlined_call_operand.vmem [shape: f32[8,512], index: 2, kind: input, shape index: {}]
  %s3 = inlined_call_operand.vmem [shape: f32[72,512], index: 3, kind: input, shape index: {}]
  %s4 = inlined_call_operand.vmem [shape: f32[8,512], index: 4, kind: output, shape index: {}]
  %s5 = sld [smem:[#allocation0]]
  $region72: #{resnet_block_forward.3} parent=0
    _
  %s7 = ssub.s32 1, %s5
  %s8 = scalar_select 0, %s7, %s5
  $region1: #{resnet_block_forward.3} parent=0
    #allocation2 [shape = 'u8[147456]{0}', space=vmem, size = 0x24000, scoped, tag = 'input window, operand 3']
    loop: start=0, step=1, limit=4
    $region2: #{resnet_block_forward.3} parent=1 // loop_pre_header
      _
    $region3: #{resnet_block_forward.3} parent=1 // loop_header
      %s10 = sphi 0, %s14
      %p11 = scmp.ge.s32.totalorder %s10, 4
      %s18 = sphi 0, %s18
      %s20 = sphi 0, %s18
      %s21 = sphi 0, %s20
      %s35 = sphi 0, %s21
      %s39 = sphi 0, %s39
      %s41 = sphi 0, %s39
      %s42 = sphi 0, %s41
      %s56 = sphi 0, %s42
      %s62 = sphi 0, %s64
      %s65 = sphi 0, %s62
      %s66 = sphi 0, %s65
      %s82 = sphi 0, %s66
      %s88 = sphi 0, %s90
      %s91 = sphi 0, %s88
      %s92 = sphi 0, %s91
      %s108 = sphi 0, %s92
      %s114 = sphi 0, %s116
      %s117 = sphi 0, %s114
      %s118 = sphi 0, %s117
      %s134 = sphi 0, %s118
    $region4: #{resnet_block_forward.3} parent=1 // loop_header_branch
      %13 = sbr.rel (%p11) target = $region8
    $region5: #{resnet_block_forward.3} parent=1 // loop_body
      %s15 = ssub.s32 %s10, 1
      %s16 = ssub.s32 %s10, 2
      %s17 = sadd.s32 %s10, 1
      %s19 = sadd.s32 %s18, 1
      %p22 = scmp.eq.s32.totalorder %s10, 1
      %p23 = scmp.ne.s32.totalorder %s18, %s20
      %p24 = scmp.eq.s32.totalorder %s10, 0
      %p25 = por %p23, %p24
      %p26 = scmp.ne.s32.totalorder %s18, %s20
      %p27 = scmp.eq.s32.totalorder %s15, 1
      %p28 = por %p26, %p27
      %p29 = scmp.ne.s32.totalorder %s20, %s21
      %p30 = scmp.eq.s32.totalorder %s15, 0
      %p31 = por %p29, %p30
      %p32 = scmp.ne.s32.totalorder %s20, %s21
      %p33 = scmp.eq.s32.totalorder %s16, 1
      %p34 = por %p32, %p33
      %p36 = scmp.ne.s32.totalorder %s21, %s35
      %p37 = scmp.eq.s32.totalorder %s16, 0
      %p38 = por %p36, %p37
      %s40 = sadd.s32 %s39, 1
      %p43 = scmp.eq.s32.totalorder %s10, 1
      %p44 = scmp.ne.s32.totalorder %s39, %s41
      %p45 = scmp.eq.s32.totalorder %s10, 0
      %p46 = por %p44, %p45
      %p47 = scmp.ne.s32.totalorder %s39, %s41
      %p48 = scmp.eq.s32.totalorder %s15, 1
      %p49 = por %p47, %p48
      %p50 = scmp.ne.s32.totalorder %s41, %s42
      %p51 = scmp.eq.s32.totalorder %s15, 0
      %p52 = por %p50, %p51
      %p53 = scmp.ne.s32.totalorder %s41, %s42
      %p54 = scmp.eq.s32.totalorder %s16, 1
      %p55 = por %p53, %p54
      %p57 = scmp.ne.s32.totalorder %s42, %s56
      %p58 = scmp.eq.s32.totalorder %s16, 0
      %p59 = por %p57, %p58
      %s60 = ssub.s32 %s10, %s17
      %p61 = scmp.eq.s32.totalorder %s60, 0
      %s63 = sadd.s32 %s62, 1
      %s64 = scalar_select %p61, %s62, %s63
      %p67 = pneg %p61
      %p68 = scmp.eq.s32.totalorder %s10, 1
      %p69 = por %p67, %p68
      %p70 = scmp.ne.s32.totalorder %s62, %s65
      %p71 = scmp.eq.s32.totalorder %s10, 0
      %p72 = por %p70, %p71
      %p73 = scmp.ne.s32.totalorder %s62, %s65
      %p74 = scmp.eq.s32.totalorder %s15, 1
      %p75 = por %p73, %p74
      %p76 = scmp.ne.s32.totalorder %s65, %s66
      %p77 = scmp.eq.s32.totalorder %s15, 0
      %p78 = por %p76, %p77
      %p79 = scmp.ne.s32.totalorder %s65, %s66
      %p80 = scmp.eq.s32.totalorder %s16, 1
      %p81 = por %p79, %p80
      %p83 = scmp.ne.s32.totalorder %s66, %s82
      %p84 = scmp.eq.s32.totalorder %s16, 0
      %p85 = por %p83, %p84
      %s86 = ssub.s32 %s10, %s17
      %p87 = scmp.eq.s32.totalorder %s86, 0
      %s89 = sadd.s32 %s88, 1
      %s90 = scalar_select %p87, %s88, %s89
      %p93 = pneg %p87
      %p94 = scmp.eq.s32.totalorder %s10, 1
      %p95 = por %p93, %p94
      %p96 = scmp.ne.s32.totalorder %s88, %s91
      %p97 = scmp.eq.s32.totalorder %s10, 0
      %p98 = por %p96, %p97
      %p99 = scmp.ne.s32.totalorder %s88, %s91
      %p100 = scmp.eq.s32.totalorder %s15, 1
      %p101 = por %p99, %p100
      %p102 = scmp.ne.s32.totalorder %s91, %s92
      %p103 = scmp.eq.s32.totalorder %s15, 0
      %p104 = por %p102, %p103
      %p105 = scmp.ne.s32.totalorder %s91, %s92
      %p106 = scmp.eq.s32.totalorder %s16, 1
      %p107 = por %p105, %p106
      %p109 = scmp.ne.s32.totalorder %s92, %s108
      %p110 = scmp.eq.s32.totalorder %s16, 0
      %p111 = por %p109, %p110
      %s112 = ssub.s32 %s10, %s17
      %p113 = scmp.eq.s32.totalorder %s112, 0
      %s115 = sadd.s32 %s114, 1
      %s116 = scalar_select %p113, %s114, %s115
      %p119 = pneg %p113
      %p120 = scmp.eq.s32.totalorder %s10, 1
      %p121 = por %p119, %p120
      %p122 = scmp.ne.s32.totalorder %s114, %s117
      %p123 = scmp.eq.s32.totalorder %s10, 0
      %p124 = por %p122, %p123
      %p125 = scmp.ne.s32.totalorder %s114, %s117
      %p126 = scmp.eq.s32.totalorder %s15, 1
      %p127 = por %p125, %p126
      %p128 = scmp.ne.s32.totalorder %s117, %s118
      %p129 = scmp.eq.s32.totalorder %s15, 0
      %p130 = por %p128, %p129
      %p131 = scmp.ne.s32.totalorder %s117, %s118
      %p132 = scmp.eq.s32.totalorder %s16, 1
      %p133 = por %p131, %p132
      %p135 = scmp.ne.s32.totalorder %s118, %s134
      %p136 = scmp.eq.s32.totalorder %s16, 0
      %p137 = por %p135, %p136
      %p138 = scmp.le.s32.totalorder 1, %s10
      %p139 = scmp.lt.s32.totalorder %s10, 3
      %p140 = pnand %p138, %p139
      %p141 = pneg %p140
      // Predicated region
      $region9: #{resnet_block_forward.3} parent=5 // pred_check
        _
      $region10: #{resnet_block_forward.3} parent=5 // pred_check_branch
        %143 = sbr.rel (%p140) target = $region12
      $region11: #{resnet_block_forward.3} parent=5 // pred_region
        %s144 = ssub.s32 %s10, 1
        // Predicated region
        $region13: #{resnet_block_forward.3} parent=11 // pred_check
          %p145 = pneg %p31
        $region14: #{resnet_block_forward.3} parent=11 // pred_check_branch
          %147 = sbr.rel (%p145) target = $region16
        $region15: #{resnet_block_forward.3} parent=11 // pred_region
          _
        $region16: #{resnet_block_forward.3} parent=11 // pred_fallthru
          _
        // Predicated region
        $region17: #{resnet_block_forward.3} parent=11 // pred_check
          %p148 = pneg %p52
        $region18: #{resnet_block_forward.3} parent=11 // pred_check_branch
          %150 = sbr.rel (%p148) target = $region20
        $region19: #{resnet_block_forward.3} parent=11 // pred_region
          _
        $region20: #{resnet_block_forward.3} parent=11 // pred_fallthru
          _
      $region12: #{resnet_block_forward.3} parent=5 // pred_fallthru
        _
      %p151 = scmp.lt.s32.totalorder %s10, 2
      // Predicated region
      $region21: #{resnet_block_forward.3} parent=5 // pred_check
        %p152 = pneg %p151
      $region22: #{resnet_block_forward.3} parent=5 // pred_check_branch
        %154 = sbr.rel (%p152) target = $region24
      $region23: #{resnet_block_forward.3} parent=5 // pred_region
        // Predicated region
        $region25: #{resnet_block_forward.3} parent=23 // pred_check
          %p155 = pneg %p72
        $region26: #{resnet_block_forward.3} parent=23 // pred_check_branch
          %157 = sbr.rel (%p155) target = $region28
        $region27: #{resnet_block_forward.3} parent=23 // pred_region
          %s158 = smul.u32 2, %s10
          %p159 = scmp.lt.s32.totalorder %s158, 3
          %s160 = scalar_select %p159, %s158, 3
          %s161 = smul.addr %s160, 8
          %s162 = scalar_lea.vmem %s2, %s161
          %s163 = smul.u32 2, %s10
        $region28: #{resnet_block_forward.3} parent=23 // pred_fallthru
          _
        // Predicated region
        $region29: #{resnet_block_forward.3} parent=23 // pred_check
          %p164 = pneg %p98
        $region30: #{resnet_block_forward.3} parent=23 // pred_check_branch
          %166 = sbr.rel (%p164) target = $region32
        $region31: #{resnet_block_forward.3} parent=23 // pred_region
          %s167 = sand.u32 %s88, 1
          %s168 = sand.u32 %s88, 1
          %s169 = smul.addr %s168, 144
          %s170 = scalar_lea.vmem [#allocation2], %s169
          %s171 = smul.u32 2, %s10
          %s172 = smul.addr %s171, 8
          %s173 = scalar_lea.vmem %s3, %s172
          // Predicated region
          $region33: #{resnet_block_forward.3} parent=31 // pred_check
            _
          $region34: #{resnet_block_forward.3} parent=31 // pred_check_branch
            %175 = sbr.rel (0) target = $region36
          $region35: #{resnet_block_forward.3} parent=31 // pred_region
            // Predicated region
            $region37: #{resnet_block_forward.3} parent=35 // pred_check
              _
            $region38: #{resnet_block_forward.3} parent=35 // pred_check_branch
              %177 = sbr.rel (0) target = $region40
            $region39: #{resnet_block_forward.3} parent=35 // pred_region
              loop: start=0, step=1, limit=1
              $region41: #{resnet_block_forward.3} parent=39 // loop_pre_header
                _
              $region42: #{resnet_block_forward.3} parent=39 // loop_header
                %s179 = sphi 0, %s183
                %p180 = scmp.ge.s32.totalorder %s179, 1
                %s184 = sphi %s173, %s173
                %s185 = sphi %s170, %s170
              $region43: #{resnet_block_forward.3} parent=39 // loop_header_branch
                %182 = sbr.rel (%p180) target = $region47
              $region44: #{resnet_block_forward.3} parent=39 // loop_body
                %v186 = vld [vmem:[%s184] sm:$0xff]
                %187 = vst [vmem:[%s185] sm:$0xff] %v186
                %v188 = vld [vmem:[%s184 + $0x8] sm:$0xff]
                %189 = vst [vmem:[%s185 + $0x8] sm:$0xff] %v188
                %v190 = vld [vmem:[%s184 + $0x20] sm:$0xff]
                %191 = vst [vmem:[%s185 + $0x10] sm:$0xff] %v190
                %v192 = vld [vmem:[%s184 + $0x28] sm:$0xff]
                %193 = vst [vmem:[%s185 + $0x18] sm:$0xff] %v192
                %v194 = vld [vmem:[%s184 + $0x40] sm:$0xff]
                %195 = vst [vmem:[%s185 + $0x20] sm:$0xff] %v194
                %v196 = vld [vmem:[%s184 + $0x48] sm:$0xff]
                %197 = vst [vmem:[%s185 + $0x28] sm:$0xff] %v196
                %v198 = vld [vmem:[%s184 + $0x60] sm:$0xff]
                %199 = vst [vmem:[%s185 + $0x30] sm:$0xff] %v198
                %v200 = vld [vmem:[%s184 + $0x68] sm:$0xff]
                %201 = vst [vmem:[%s185 + $0x38] sm:$0xff] %v200
                %v202 = vld [vmem:[%s184 + $0x80] sm:$0xff]
                %203 = vst [vmem:[%s185 + $0x40] sm:$0xff] %v202
                %v204 = vld [vmem:[%s184 + $0x88] sm:$0xff]
                %205 = vst [vmem:[%s185 + $0x48] sm:$0xff] %v204
                %v206 = vld [vmem:[%s184 + $0xa0] sm:$0xff]
                %207 = vst [vmem:[%s185 + $0x50] sm:$0xff] %v206
                %v208 = vld [vmem:[%s184 + $0xa8] sm:$0xff]
                %209 = vst [vmem:[%s185 + $0x58] sm:$0xff] %v208
                %v210 = vld [vmem:[%s184 + $0xc0] sm:$0xff]
                %211 = vst [vmem:[%s185 + $0x60] sm:$0xff] %v210
                %v212 = vld [vmem:[%s184 + $0xc8] sm:$0xff]
                %213 = vst [vmem:[%s185 + $0x68] sm:$0xff] %v212
                %v214 = vld [vmem:[%s184 + $0xe0] sm:$0xff]
                %215 = vst [vmem:[%s185 + $0x70] sm:$0xff] %v214
                %v216 = vld [vmem:[%s184 + $0xe8] sm:$0xff]
                %217 = vst [vmem:[%s185 + $0x78] sm:$0xff] %v216
                %v218 = vld [vmem:[%s184 + $0x100] sm:$0xff]
                %219 = vst [vmem:[%s185 + $0x80] sm:$0xff] %v218
                %v220 = vld [vmem:[%s184 + $0x108] sm:$0xff]
                %221 = vst [vmem:[%s185 + $0x88] sm:$0xff] %v220
              $region45: #{resnet_block_forward.3} parent=39 // loop_footer
                %s183 = sadd.s32 1, %s179
              $region46: #{resnet_block_forward.3} parent=39 // loop_footer_branch
                %178 = sbr.rel target = $region42
              $region47: #{resnet_block_forward.3} parent=39 // loop_exit
                _
            $region40: #{resnet_block_forward.3} parent=35 // pred_fallthru
              _
            // Predicated region
            $region48: #{resnet_block_forward.3} parent=35 // pred_check
              _
            $region49: #{resnet_block_forward.3} parent=35 // pred_check_branch
              %223 = sbr.rel target = $region51
            $region50: #{resnet_block_forward.3} parent=35 // pred_region
              _
            $region51: #{resnet_block_forward.3} parent=35 // pred_fallthru
              _
          $region36: #{resnet_block_forward.3} parent=31 // pred_fallthru
            _
          %224 = vnop
        $region32: #{resnet_block_forward.3} parent=23 // pred_fallthru
          _
      $region24: #{resnet_block_forward.3} parent=5 // pred_fallthru
        _
      %p225 = scmp.le.s32.totalorder 1, %s10
      %p226 = scmp.lt.s32.totalorder %s10, 3
      %p227 = pnand %p225, %p226
      %p228 = pneg %p227
      // Predicated region
      $region52: #{resnet_block_forward.3} parent=5 // pred_check
        _
      $region53: #{resnet_block_forward.3} parent=5 // pred_check_branch
        %230 = sbr.rel (%p227) target = $region55
      $region54: #{resnet_block_forward.3} parent=5 // pred_region
        %s231 = ssub.s32 %s10, 1
        %s232 = sand.u32 %s91, 1
        %s233 = sand.u32 %s91, 1
        %s234 = smul.addr %s233, 144
        %s235 = scalar_lea.vmem [#allocation2], %s234
        // Predicated region
        $region56: #{resnet_block_forward.3} parent=54 // pred_check
          %p236 = pneg %p104
        $region57: #{resnet_block_forward.3} parent=54 // pred_check_branch
          %238 = sbr.rel (%p236) target = $region59
        $region58: #{resnet_block_forward.3} parent=54 // pred_region
          _
        $region59: #{resnet_block_forward.3} parent=54 // pred_fallthru
          _
        %p239 = pneg %p31
        %p240 = pneg %p28
        %p241 = pneg %p52
        %p242 = pneg %p49
        %s243 = smul.u32 2, %s15
        %p244 = scmp.lt.s32.totalorder %s243, 3
        %s245 = scalar_select %p244, %s243, 3
        %s246 = smul.addr %s245, 8
        %s247 = scalar_lea.vmem %s2, %s246
        %p248 = pneg %p78
        %p249 = pneg %p75
        %s250 = sand.u32 %s91, 1
        %s251 = sand.u32 %s91, 1
        %s252 = smul.addr %s251, 144
        %s253 = scalar_lea.vmem [#allocation2], %s252
        %p254 = pneg %p104
        %p255 = pneg %p101
        %p256 = pneg %p130
        %p257 = pneg %p127
        %s258 = smul.u32 2, %s15
        %p259 = scmp.lt.s32.totalorder %s258, 3
        %s260 = scalar_select %p259, %s258, 3
        %s261 = smul.addr %s260, 8
        %s262 = scalar_lea.vmem %s4, %s261
        %s263 = smul.u32 2, %s15
        %p264 = scmp.lt.s32.totalorder %s263, 3
        %s265 = scalar_select %p264, %s263, 3
        %s266 = smul.addr %s265, 8
        %s267 = scalar_lea.vmem %s2, %s266
        %s268 = smul.u32 2, %s15
        %s269 = smul.u32 2, %s15
        %s270 = smul.u32 2, %s15
        %p271 = scmp.lt.s32.totalorder %s270, 3
        %s272 = scalar_select %p271, %s270, 3
        %s273 = smul.addr %s272, 8
        %s274 = scalar_lea.vmem %s4, %s273
        %s275 = smul.u32 2, %s15
        %v276 = vld [vmem:[%s0] sm:$0xff]
        %v277 = vld [vmem:[%s235] sm:$0xff]
        %v278 = vld [vmem:[%s235 + $0x8] sm:$0xff]
        %v279 = vld [vmem:[%s235 + $0x10] sm:$0xff]
        %v280 = vld [vmem:[%s235 + $0x18] sm:$0xff]
        %v281 = vld [vmem:[%s235 + $0x20] sm:$0xff]
        %v282 = vld [vmem:[%s235 + $0x28] sm:$0xff]
        %v283 = vld [vmem:[%s235 + $0x30] sm:$0xff]
        %v284 = vld [vmem:[%s235 + $0x38] sm:$0xff]
        %v285 = vld [vmem:[%s235 + $0x40] sm:$0xff]
        %v286 = vld [vmem:[%s235 + $0x48] sm:$0xff]
        %v287 = vld [vmem:[%s235 + $0x50] sm:$0xff]
        %v288 = vld [vmem:[%s235 + $0x58] sm:$0xff]
        %v289 = vld [vmem:[%s235 + $0x60] sm:$0xff]
        %v290 = vld [vmem:[%s235 + $0x68] sm:$0xff]
        %v291 = vld [vmem:[%s235 + $0x70] sm:$0xff]
        %v292 = vld [vmem:[%s235 + $0x78] sm:$0xff]
        %v293 = vld [vmem:[%s235 + $0x80] sm:$0xff]
        %v294 = vld [vmem:[%s235 + $0x88] sm:$0xff]
        %v295 = vld [vmem:[%s1] sm:$0xff]
        %297 = vset.pattern.permute.xlu0 0
        %298 = vperm.xlu0 %297, %v295
        %v299 = vpop.permute.xlu0 %298
        %vm301 = vcmask 588800
        %v303 = vsel %vm301, %v276, 0
        %305 = vmatprep.subr.mxu0 %v278
        %306 = vmatpush1.msra.mxu0 %v277
        %307 = vmatprep.subr.mxu0 %v280
        %308 = vmatpush1.msra.mxu0 %v279
        %309 = vmatprep.subr.mxu0 %v282
        %310 = vmatpush1.msra.mxu0 %v281
        %311 = vmatprep.subr.mxu0 %v284
        %312 = vmatpush1.msra.mxu0 %v283
        %313 = vmatprep.subr.mxu0 %v286
        %314 = vmatpush1.msra.mxu0 %v285
        %315 = vmatprep.subr.mxu0 %v288
        %316 = vmatpush1.msra.mxu0 %v287
        %317 = vmatprep.subr.mxu0 %v290
        %318 = vmatpush1.msra.mxu0 %v289
        %319 = vmatprep.subr.mxu0 %v292
        %320 = vmatpush1.msra.mxu0 %v291
        %321 = vmatprep.subr.mxu0 %v294
        %322 = vmatpush1.msra.mxu0 %v293
        %323 = vmatprep.subr.mxu0 0.0
        %324 = vmatpush1.msra.mxu0 0.0
        %325 = vmatprep.subr.mxu0 0.0
        %326 = vmatpush1.msra.mxu0 0.0
        %327 = vmatprep.subr.mxu0 0.0
        %328 = vmatpush1.msra.mxu0 0.0
        %329 = vmatprep.subr.mxu0 0.0
        %330 = vmatpush1.msra.mxu0 0.0
        %331 = vmatprep.subr.mxu0 0.0
        %332 = vmatpush1.msra.mxu0 0.0
        %333 = vmatprep.subr.mxu0 0.0
        %334 = vmatpush1.msra.mxu0 0.0
        %335 = vmatprep.subr.mxu0 0.0
        %336 = vmatpush1.msra.mxu0 0.0
        %337 = vmatprep.subr.mxu0 0.0
        %338 = vmatpush1.msra.mxu0 0.0
        %339 = vmatprep.subr.mxu0 0.0
        %340 = vmatpush1.msra.mxu0 0.0
        %341 = vmatprep.subr.mxu0 0.0
        %342 = vmatpush1.msra.mxu0 0.0
        %343 = vmatprep.subr.mxu0 0.0
        %344 = vmatpush1.msra.mxu0 0.0
        %345 = vmatprep.subr.mxu0 0.0
        %346 = vmatpush1.msra.mxu0 0.0
        %347 = vmatprep.subr.mxu0 0.0
        %348 = vmatpush1.msra.mxu0 0.0
        %349 = vmatprep.subr.mxu0 0.0
        %350 = vmatpush1.msra.mxu0 0.0
        %351 = vmatprep.subr.mxu0 0.0
        %352 = vmatpush1.msra.mxu0 0.0
        %353 = vmatprep.subr.mxu0 0.0
        %354 = vmatpush1.msra.mxu0 0.0
        %355 = vmatprep.subr.mxu0 0.0
        %356 = vmatpush1.msra.mxu0 0.0
        %357 = vmatprep.subr.mxu0 0.0
        %358 = vmatpush1.msra.mxu0 0.0
        %359 = vmatprep.subr.mxu0 0.0
        %360 = vmatpush1.msra.mxu0 0.0
        %361 = vmatprep.subr.mxu0 0.0
        %362 = vmatpush1.msra.mxu0 0.0
        %363 = vmatprep.subr.mxu0 0.0
        %364 = vmatpush1.msra.mxu0 0.0
        %365 = vmatprep.subr.mxu0 0.0
        %366 = vmatpush1.msra.mxu0 0.0
        %367 = vmatprep.subr.mxu0 0.0
        %368 = vmatpush1.msra.mxu0 0.0
        %369 = vmatprep.mubr.f32.mxu0 0.0
        %370 = vmatmul.mubr.f32.gmra.mrb[0].mxu0 %v303
        %v371 = vpop.f32.mrb[0].mxu0
        %v372 = vadd.f32 %v299, %v371
        %v373 = vpop.f32.mrb[0].mxu0
        %v374 = vadd.f32 %v299, %v373
        %375 = vdwg.mxu0
        %v376 = vmul.f32 %v372, 0.16666667
        %v377 = vmul.f32 %v374, 0.16666667
        %v378 = vld [vmem:[%s267] sm:$0xff]
        %v379 = vld [vmem:[%s267 + $0x8] sm:$0xff]
        %v380 = vadd.f32 %v378, %v376
        %v381 = vadd.f32 %v379, %v377
        %vm382 = vcmp.ge.f32.partialorder %v380, 0.0
        %vm383 = vcmp.ge.f32.partialorder %v381, 0.0
        %v384 = vmul.f32 %v380, 0.2
        %v385 = vmul.f32 %v381, 0.2
        %v386 = vsel %vm382, %v380, %v384
        %v387 = vsel %vm383, %v381, %v385
        %v388 = vmul.f32 %v386, %v386
        %v389 = vmul.f32 %v387, %v387
        %v390 = vrot.slane %v388, 4
        %v391 = vadd.f32 %v388, %v390
        %v392 = vrot.slane %v391, 2
        %v393 = vadd.f32 %v391, %v392
        %v394 = vrot.slane %v393, 1
        %v395 = vadd.f32 %v393, %v394
        %v396 = vrot.slane %v389, 4
        %v397 = vadd.f32 %v389, %v396
        %v398 = vrot.slane %v397, 2
        %v399 = vadd.f32 %v397, %v398
        %v400 = vrot.slane %v399, 1
        %v401 = vadd.f32 %v399, %v400
        %v402 = vrcp.pop 8.0
        %v403 = vmul.f32 %v395, %v402
        %v404 = vmul.f32 %v401, %v402
        %v405 = vadd.f32 %v403, 1e-08
        %v406 = vadd.f32 %v404, 1e-08
        %v407 = vrsqrt.pop %v405
        %v408 = vrsqrt.pop %v406
        %v409 = vmul.f32 %v386, %v407
        %v410 = vmul.f32 %v387, %v408
        %411 = vst [vmem:[%s274] sm:$0xff] %v409
        %412 = vst [vmem:[%s274 + $0x8] sm:$0xff] %v410
        %s413 = smul.u32 2, %s15
        %p414 = scmp.lt.s32.totalorder %s413, 3
        %s415 = scalar_select %p414, %s413, 3
        %s416 = smul.addr %s415, 8
        %s417 = scalar_lea.vmem %s4, %s416
        // Predicated region
        $region60: #{resnet_block_forward.3} parent=54 // pred_check
          %p418 = pneg %p127
        $region61: #{resnet_block_forward.3} parent=54 // pred_check_branch
          %420 = sbr.rel (%p418) target = $region63
        $region62: #{resnet_block_forward.3} parent=54 // pred_region
          %s421 = smul.u32 2, %s15
        $region63: #{resnet_block_forward.3} parent=54 // pred_fallthru
          _
      $region55: #{resnet_block_forward.3} parent=5 // pred_fallthru
        _
      %p422 = scmp.le.s32.totalorder 2, %s10
      // Predicated region
      $region64: #{resnet_block_forward.3} parent=5 // pred_check
        %p423 = pneg %p422
      $region65: #{resnet_block_forward.3} parent=5 // pred_check_branch
        %425 = sbr.rel (%p423) target = $region67
      $region66: #{resnet_block_forward.3} parent=5 // pred_region
        %s426 = ssub.s32 %s10, 2
        // Predicated region
        $region68: #{resnet_block_forward.3} parent=66 // pred_check
          %p427 = pneg %p133
        $region69: #{resnet_block_forward.3} parent=66 // pred_check_branch
          %429 = sbr.rel (%p427) target = $region71
        $region70: #{resnet_block_forward.3} parent=66 // pred_region
          %s430 = smul.u32 2, %s16
          %p431 = scmp.lt.s32.totalorder %s430, 3
          %s432 = scalar_select %p431, %s430, 3
          %s433 = smul.addr %s432, 8
          %s434 = scalar_lea.vmem %s4, %s433
        $region71: #{resnet_block_forward.3} parent=66 // pred_fallthru
          _
      $region67: #{resnet_block_forward.3} parent=5 // pred_fallthru
        _
    $region6: #{resnet_block_forward.3} parent=1 // loop_footer
      %s14 = sadd.s32 1, %s10
    $region7: #{resnet_block_forward.3} parent=1 // loop_footer_branch
      %9 = sbr.rel target = $region3
    $region8: #{resnet_block_forward.3} parent=1 // loop_exit
      _

</llo_original>
